<compile_context>
chip_gen: v5e
topology: v5e:2x2
jax: 0.10.0
libtpu: 0.0.40
codegen_flags: <defaults>
</compile_context>

<pallas_src>
import functools

import jax
import jax.numpy as jnp
from jax import lax
from jax.experimental import pallas as pl
from jax.experimental.pallas import tpu as pltpu


def _cdiv(a, b):
    return -(-a // b)


def _vmem_plan():
    """(scoped vmem_limit_bytes, per-tile byte budget) for this generation."""
    try:
        cap = int(pltpu.get_tpu_info().vmem_capacity_bytes)
    except Exception:
        cap = 64 << 20  # conservative (v7x-sized) fallback
    if cap >= (96 << 20):                      # v5e / v6e: 128 MiB physical
        limit, budget = 64 << 20, 6 << 20
    else:                                      # v7x: 64 MiB per TensorCore
        limit = min(48 << 20, max(cap - (16 << 20), 16 << 20))
        budget = 4 << 20
    return limit, min(budget, limit // 8)


def _choose_tiles(nc, hw, itemsize, budget):
    """Biggest (row, lane) tile within `budget` bytes that keeps blocks legal:
    sublane dim a multiple of the dtype packing (or the full dim), lane dim a
    multiple of 128 (or the full dim)."""
    sub = max(8, 32 // max(itemsize, 1))       # 8 f32 / 16 bf16 / 32 int8
    lane_min = min(hw, 128)
    max_tr = max(sub, (budget // (lane_min * itemsize)) // sub * sub)
    tr = nc if nc <= max_tr else max_tr        # full dim always legal
    if hw <= 128 or tr * hw * itemsize <= budget:
        tl = hw                                # full lane dim (always legal)
    else:
        tl = max(128, (budget // (tr * itemsize)) // 128 * 128)
    return tr, tl


# ----------------------------------------------------------------------------
# Kernels
# ----------------------------------------------------------------------------
def _make_stats_kernel(tl, hw):
    """Pass 1: per-row partial sum / sum-of-squares for this lane tile."""
    ragged = (hw % tl) != 0

    def kernel(x_ref, sum_ref, sq_ref):
        x = x_ref[...].astype(jnp.float32)                     # (TR, TL)
        if ragged:  # zero out-of-bounds lanes of the last lane tile
            j = pl.program_id(1)
            col = lax.broadcasted_iota(jnp.int32, x.shape, 1)
            x = jnp.where(col < hw - j * tl, x, 0.0)
        # Per-row reduce: mostly VPU lane-folds + one XLU reduce per vreg row
        # group; hidden under the multi-MiB tile DMA (kernel is HBM-bound).
        sum_ref[...] = jnp.sum(x, axis=1, keepdims=True)[None]     # (1, TR, 1)
        sq_ref[...] = jnp.sum(x * x, axis=1, keepdims=True)[None]  # (1, TR, 1)

    return kernel


def _normalize_kernel(x_ref, scale_ref, shift_ref, o_ref):
    """Pass 2: y = x * scale_row + shift_row (lane-dense, unmasked stores)."""
    x = x_ref[...].astype(jnp.float32)
    o_ref[...] = (x * scale_ref[...] + shift_ref[...]).astype(o_ref.dtype)


# ----------------------------------------------------------------------------
# Forward of MultiLevelNorm(norm_layer=BatchNorm2d, num_levels, C)
# ----------------------------------------------------------------------------
@functools.partial(jax.jit, static_argnames=("level", "eps", "tile_budget_bytes"))
def multi_level_norm_forward(x_nchw, gammas, betas, level, eps=1e-5,
                             tile_budget_bytes=None):
    """x_nchw: (N, C, H, W); gammas/betas: (num_levels, C); level: static int
    (the module's self.level; its 1000 init is a sentinel the caller sets)."""
    N, C, H, W = x_nchw.shape
    NC, HW = N * C, H * W
    x2d = x_nchw.reshape(NC, HW)               # free view of contiguous NCHW
    itemsize = x2d.dtype.itemsize

    vmem_limit, budget = _vmem_plan()
    if tile_budget_bytes is not None:          # test hook: force small tiles
        budget = int(tile_budget_bytes)
    tr, tl = _choose_tiles(NC, HW, itemsize, budget)
    n_rows, n_lanes = _cdiv(NC, tr), _cdiv(HW, tl)
    grid = (n_rows, n_lanes)
    cparams = pltpu.CompilerParams(
        dimension_semantics=("parallel", "parallel"),
        vmem_limit_bytes=vmem_limit,
    )

    # ---- Pass 1: streamed per-row / per-lane-tile partial sums (f32) -------
    sums, sqs = pl.pallas_call(
        _make_stats_kernel(tl, HW),
        out_shape=(
            jax.ShapeDtypeStruct((n_lanes, NC, 1), jnp.float32),
            jax.ShapeDtypeStruct((n_lanes, NC, 1), jnp.float32),
        ),
        grid=grid,
        in_specs=[pl.BlockSpec((tr, tl), lambda i, j: (i, j))],
        out_specs=(
            pl.BlockSpec((1, tr, 1), lambda i, j: (j, i, 0)),
            pl.BlockSpec((1, tr, 1), lambda i, j: (j, i, 0)),
        ),
        compiler_params=cparams,
    )(x2d)

    # ---- Tiny combine (fused by jit): fold partials over N and lane tiles --
    # var = E[x^2] - E[x]^2 in f32 with per-tile partials.
    # TODO(synk): Welford / mean-offset pass if |mean| >> std ever matters.
    count = jnp.float32(N * HW)
    per_chan_sum = jnp.sum(sums.reshape(n_lanes, N, C), axis=(0, 1))   # (C,)
    per_chan_sq = jnp.sum(sqs.reshape(n_lanes, N, C), axis=(0, 1))     # (C,)
    mean = per_chan_sum / count
    var = jnp.maximum(per_chan_sq / count - mean * mean, 0.0)          # biased
    inv_std = lax.rsqrt(var + jnp.float32(eps))

    gamma = gammas[level].astype(jnp.float32)   # static level dispatch
    beta = betas[level].astype(jnp.float32)
    scale = gamma * inv_std                     # (C,)
    shift = beta - mean * scale                 # (C,)
    # Per-row (n*C + c) parameter columns; tiny broadcast, fused under jit.
    scale_rows = jnp.broadcast_to(scale[None, :], (N, C)).reshape(NC, 1)
    shift_rows = jnp.broadcast_to(shift[None, :], (N, C)).reshape(NC, 1)

    # ---- Pass 2: streamed normalize (1 mul + 1 add / element) --------------
    y2d = pl.pallas_call(
        _normalize_kernel,
        out_shape=jax.ShapeDtypeStruct((NC, HW), x2d.dtype),
        grid=grid,
        in_specs=[
            pl.BlockSpec((tr, tl), lambda i, j: (i, j)),
            pl.BlockSpec((tr, 1), lambda i, j: (i, 0)),
            pl.BlockSpec((tr, 1), lambda i, j: (i, 0)),
        ],
        out_specs=pl.BlockSpec((tr, tl), lambda i, j: (i, j)),
        compiler_params=cparams,
    )(x2d, scale_rows, shift_rows)

    # TODO(synk): BatchNorm2d running_mean/running_var buffer updates (module
    # training-time state) are not modeled here.
    return y2d.reshape(N, C, H, W)


# ----------------------------------------------------------------------------
# Pure-JAX reference (training-mode BatchNorm2d for the selected level)
# ----------------------------------------------------------------------------
def _reference(x_nchw, gammas, betas, level, eps=1e-5):
    x = x_nchw.astype(jnp.float32)
    mean = jnp.mean(x, axis=(0, 2, 3), keepdims=True)
    var = jnp.mean((x - mean) ** 2, axis=(0, 2, 3), keepdims=True)
    g = gammas[level].astype(jnp.float32)[None, :, None, None]
    b = betas[level].astype(jnp.float32)[None, :, None, None]
    return ((x - mean) * lax.rsqrt(var + eps) * g + b).astype(x_nchw.dtype)


if __name__ == "__main__":
    key = jax.random.PRNGKey(0)
    kx, kg, kb, kx2 = jax.random.split(key, 4)

    num_levels, level = 3, 1   # caller must set a valid level (init=1000 sentinel)

    # --- Main check: small NCHW activation (single-tile fast path) ----------
    N, C, H, W = 2, 4, 16, 16
    x = jax.random.normal(kx, (N, C, H, W), dtype=jnp.float32)
    gammas = 1.0 + 0.1 * jax.random.normal(kg, (num_levels, C), dtype=jnp.float32)
    betas = 0.1 * jax.random.normal(kb, (num_levels, C), dtype=jnp.float32)

    out = jax.block_until_ready(multi_level_norm_forward(x, gammas, betas, level))
    ref = _reference(x, gammas, betas, level)
    assert out.shape == (N, C, H, W)
    assert jnp.allclose(out, ref, atol=1e-4, rtol=1e-4), "mismatch vs reference"

    # --- Secondary check: ragged rows + ragged lane tiles (multi-tile grid) --
    # Force a tiny tile budget so the cdiv/masking path is exercised at small
    # shapes; production runs use the per-generation VMEM-sized budget.
    N2, C2, H2, W2 = 3, 7, 16, 18
    x2 = jax.random.normal(kx2, (N2, C2, H2, W2), dtype=jnp.float32)
    g2 = 1.0 + 0.1 * jax.random.normal(kg, (num_levels, C2), dtype=jnp.float32)
    b2 = 0.1 * jax.random.normal(kb, (num_levels, C2), dtype=jnp.float32)
    out2 = jax.block_until_ready(
        multi_level_norm_forward(x2, g2, b2, level, tile_budget_bytes=8192))
    ref2 = _reference(x2, g2, b2, level)
    assert out2.shape == (N2, C2, H2, W2)
    assert jnp.allclose(out2, ref2, atol=1e-4, rtol=1e-4), "mismatch (ragged path)"

    print("KERNEL_OK")
</pallas_src>

<mosaic_0001>
module attributes {stable_mosaic.version = 11 : i64} {
  func.func @kernel(%arg0: i32, %arg1: i32, %arg2: memref<8x256xf32, #tpu.memory_space<vmem>>, %arg3: memref<1x8x1xf32, #tpu.memory_space<vmem>>, %arg4: memref<1x8x1xf32, #tpu.memory_space<vmem>>) attributes {dimension_semantics = [#tpu.dimension_semantics<parallel>, #tpu.dimension_semantics<parallel>], iteration_bounds = array<i64: 1, 1>, scalar_prefetch = 0 : i64, scratch_operands = 0 : i64, tpu.core_type = #tpu.core_type<tc>, window_params = [{transform_indices = @transform_0, window_bounds = array<i64: 8, 256>}, {transform_indices = @transform_1, window_bounds = array<i64: 1, 8, 1>}, {transform_indices = @transform_2, window_bounds = array<i64: 1, 8, 1>}]} {
    %c0 = arith.constant 0 : index
    %c0_0 = arith.constant 0 : index
    %0 = vector.load %arg2[%c0, %c0_0] : memref<8x256xf32, #tpu.memory_space<vmem>>, vector<8x256xf32>
    %cst = arith.constant dense<0.000000e+00> : vector<8xf32>
    %1 = vector.multi_reduction <add>, %0, %cst [1] : vector<8x256xf32> to vector<8xf32>
    %2 = vector.shape_cast %1 : vector<8xf32> to vector<8x1xf32>
    %3 = vector.shape_cast %2 : vector<8x1xf32> to vector<1x8x1xf32>
    %c0_1 = arith.constant 0 : index
    %c0_2 = arith.constant 0 : index
    %c0_3 = arith.constant 0 : index
    %4 = vector.load %arg3[%c0_1, %c0_2, %c0_3] : memref<1x8x1xf32, #tpu.memory_space<vmem>>, vector<1x8x1xf32>
    tpu.vector_store %arg3[%c0_1, %c0_2, %c0_3], %3 {strides = array<i32>} : memref<1x8x1xf32, #tpu.memory_space<vmem>>, vector<1x8x1xf32>,
    %5 = arith.mulf %0, %0 : vector<8x256xf32>
    %cst_4 = arith.constant dense<0.000000e+00> : vector<8xf32>
    %6 = vector.multi_reduction <add>, %5, %cst_4 [1] : vector<8x256xf32> to vector<8xf32>
    %7 = vector.shape_cast %6 : vector<8xf32> to vector<8x1xf32>
    %8 = vector.shape_cast %7 : vector<8x1xf32> to vector<1x8x1xf32>
    %c0_5 = arith.constant 0 : index
    %c0_6 = arith.constant 0 : index
    %c0_7 = arith.constant 0 : index
    %9 = vector.load %arg4[%c0_5, %c0_6, %c0_7] : memref<1x8x1xf32, #tpu.memory_space<vmem>>, vector<1x8x1xf32>
    tpu.vector_store %arg4[%c0_5, %c0_6, %c0_7], %8 {strides = array<i32>} : memref<1x8x1xf32, #tpu.memory_space<vmem>>, vector<1x8x1xf32>,
    return
  }
  func.func @transform_0(%arg0: i32, %arg1: i32) -> (i32, i32) {
    %c0_i32 = arith.constant 0 : i32
    return %arg0, %arg1 : i32, i32
  }
  func.func @transform_1(%arg0: i32, %arg1: i32) -> (i32, i32, i32) {
    %c0_i32 = arith.constant 0 : i32
    %c0_i32_0 = arith.constant 0 : i32
    return %arg1, %arg0, %c0_i32 : i32, i32, i32
  }
  func.func @transform_2(%arg0: i32, %arg1: i32) -> (i32, i32, i32) {
    %c0_i32 = arith.constant 0 : i32
    %c0_i32_0 = arith.constant 0 : i32
    return %arg1, %arg0, %c0_i32 : i32, i32, i32
  }
}

module attributes {stable_mosaic.version = 11 : i64} {
  func.func @_normalize_kernel(%arg0: i32, %arg1: i32, %arg2: memref<8x256xf32, #tpu.memory_space<vmem>>, %arg3: memref<8x1xf32, #tpu.memory_space<vmem>>, %arg4: memref<8x1xf32, #tpu.memory_space<vmem>>, %arg5: memref<8x256xf32, #tpu.memory_space<vmem>>) attributes {dimension_semantics = [#tpu.dimension_semantics<parallel>, #tpu.dimension_semantics<parallel>], iteration_bounds = array<i64: 1, 1>, scalar_prefetch = 0 : i64, scratch_operands = 0 : i64, tpu.core_type = #tpu.core_type<tc>, window_params = [{transform_indices = @transform_0, window_bounds = array<i64: 8, 256>}, {transform_indices = @transform_1, window_bounds = array<i64: 8, 1>}, {transform_indices = @transform_2, window_bounds = array<i64: 8, 1>}, {transform_indices = @transform_3, window_bounds = array<i64: 8, 256>}]} {
    %c0 = arith.constant 0 : index
    %c0_0 = arith.constant 0 : index
    %0 = vector.load %arg2[%c0, %c0_0] : memref<8x256xf32, #tpu.memory_space<vmem>>, vector<8x256xf32>
    %c0_1 = arith.constant 0 : index
    %c0_2 = arith.constant 0 : index
    %1 = vector.load %arg3[%c0_1, %c0_2] : memref<8x1xf32, #tpu.memory_space<vmem>>, vector<8x1xf32>
    %2 = vector.broadcast %1 : vector<8x1xf32> to vector<8x256xf32>
    %3 = arith.mulf %0, %2 : vector<8x256xf32>
    %c0_3 = arith.constant 0 : index
    %c0_4 = arith.constant 0 : index
    %4 = vector.load %arg4[%c0_3, %c0_4] : memref<8x1xf32, #tpu.memory_space<vmem>>, vector<8x1xf32>
    %5 = vector.broadcast %4 : vector<8x1xf32> to vector<8x256xf32>
    %6 = arith.addf %3, %5 : vector<8x256xf32>
    %c0_5 = arith.constant 0 : index
    %c0_6 = arith.constant 0 : index
    %7 = vector.load %arg5[%c0_5, %c0_6] : memref<8x256xf32, #tpu.memory_space<vmem>>, vector<8x256xf32>
    tpu.vector_store %arg5[%c0_5, %c0_6], %6 {strides = array<i32>} : memref<8x256xf32, #tpu.memory_space<vmem>>, vector<8x256xf32>,
    return
  }
  func.func @transform_0(%arg0: i32, %arg1: i32) -> (i32, i32) {
    %c0_i32 = arith.constant 0 : i32
    return %arg0, %arg1 : i32, i32
  }
  func.func @transform_1(%arg0: i32, %arg1: i32) -> (i32, i32) {
    %c0_i32 = arith.constant 0 : i32
    %c0_i32_0 = arith.constant 0 : i32
    return %arg0, %c0_i32 : i32, i32
  }
  func.func @transform_2(%arg0: i32, %arg1: i32) -> (i32, i32) {
    %c0_i32 = arith.constant 0 : i32
    %c0_i32_0 = arith.constant 0 : i32
    return %arg0, %c0_i32 : i32, i32
  }
  func.func @transform_3(%arg0: i32, %arg1: i32) -> (i32, i32) {
    %c0_i32 = arith.constant 0 : i32
    return %arg0, %arg1 : i32, i32
  }
}

</mosaic_0001>

<llo_original>
// kernel: multi_level_norm_forward.2
$region0: #{multi_level_norm_forward.2}
  #allocation0 [shape = 'u32[]', space=smem, size = 0x4, offset = 0x4, fixed_abs, tag = 'smem constant byte address 0x4 - core index']
  #allocation1 [shape = 'u32[72,128]{1,0:T(1,128)}', space=vmem, size = 0x9000, scoped, tag = 'internal scratch']
  %s0 = inlined_call_operand.vmem [shape: f32[8,256], index: 0, kind: input, shape index: {}]
  %s1 = inlined_call_operand.vmem [shape: f32[1,8,1], index: 1, kind: output, shape index: {0}]
  %s2 = inlined_call_operand.vmem [shape: f32[1,8,1], index: 2, kind: output, shape index: {1}]
  %3 = xla_tuple %s1, %s2
  %s4 = sld [smem:[#allocation0]]
  $region22: #{multi_level_norm_forward.2} parent=0
    _
  %s6 = ssub.s32 1, %s4
  %s7 = scalar_select 0, %s6, %s4
  // Predicated region
  $region2: #{multi_level_norm_forward.2} parent=0 // pred_check
    _
  $region3: #{multi_level_norm_forward.2} parent=0 // pred_check_branch
    %9 = sbr.rel (0) target = $region5
  $region4: #{multi_level_norm_forward.2} parent=0 // pred_region
    _
  $region5: #{multi_level_norm_forward.2} parent=0 // pred_fallthru
    _
  %v10 = vld [vmem:[%s0] sm:$0xff]
  %v11 = vld [vmem:[%s0 + $0x8] sm:$0xff]
  %v12 = vadd.f32 %v10, %v11
  %13 = vadd.xlane.f32.xlu0 %v12
  %v14 = vpop.xlane.xlu0 %13
  %vm15 = vcmask 7168
  %16 = vst.msk [vmem:[%s1] sm:$0xff] %vm15, %v14
  %v17 = vmul.f32 %v10, %v10
  %v18 = vmul.f32 %v11, %v11
  %v19 = vadd.f32 %v17, %v18
  %20 = vadd.xlane.f32.xlu0 %v19
  %v21 = vpop.xlane.xlu0 %20
  %22 = vst.msk [vmem:[%s2] sm:$0xff] %vm15, %v21
  // Predicated region
  $region6: #{multi_level_norm_forward.2} parent=0 // pred_check
    _
  $region7: #{multi_level_norm_forward.2} parent=0 // pred_check_branch
    %24 = sbr.rel (0) target = $region9
  $region8: #{multi_level_norm_forward.2} parent=0 // pred_region
    _
  $region9: #{multi_level_norm_forward.2} parent=0 // pred_fallthru
    _
  // Predicated region
  $region10: #{multi_level_norm_forward.2} parent=0 // pred_check
    _
  $region11: #{multi_level_norm_forward.2} parent=0 // pred_check_branch
    %26 = sbr.rel (0) target = $region13
  $region12: #{multi_level_norm_forward.2} parent=0 // pred_region
    _
  $region13: #{multi_level_norm_forward.2} parent=0 // pred_fallthru
    _
  // Predicated region
  $region14: #{multi_level_norm_forward.2} parent=0 // pred_check
    _
  $region15: #{multi_level_norm_forward.2} parent=0 // pred_check_branch
    %28 = sbr.rel (0) target = $region17
  $region16: #{multi_level_norm_forward.2} parent=0 // pred_region
    _
  $region17: #{multi_level_norm_forward.2} parent=0 // pred_fallthru
    _
  // Predicated region
  $region18: #{multi_level_norm_forward.2} parent=0 // pred_check
    _
  $region19: #{multi_level_norm_forward.2} parent=0 // pred_check_branch
    %30 = sbr.rel (0) target = $region21
  $region20: #{multi_level_norm_forward.2} parent=0 // pred_region
    _
  $region21: #{multi_level_norm_forward.2} parent=0 // pred_fallthru
    _

// kernel: multi_level_norm_forward.3
$region0: #{multi_level_norm_forward.3}
  #allocation0 [shape = 'u32[]', space=smem, size = 0x4, offset = 0x4, fixed_abs, tag = 'smem constant byte address 0x4 - core index']
  #allocation1 [shape = 'u32[72,128]{1,0:T(1,128)}', space=vmem, size = 0x9000, scoped, tag = 'internal scratch']
  %s0 = inlined_call_operand.vmem [shape: f32[8,256], index: 0, kind: input, shape index: {}]
  %s1 = inlined_call_operand.vmem [shape: f32[8,1], index: 1, kind: input, shape index: {}]
  %s2 = inlined_call_operand.vmem [shape: f32[8,1], index: 2, kind: input, shape index: {}]
  %s3 = inlined_call_operand.vmem [shape: f32[8,256], index: 3, kind: output, shape index: {}]
  %s4 = sld [smem:[#allocation0]]
  $region22: #{multi_level_norm_forward.3} parent=0
    _
  %s6 = ssub.s32 1, %s4
  %s7 = scalar_select 0, %s6, %s4
  // Predicated region
  $region2: #{multi_level_norm_forward.3} parent=0 // pred_check
    _
  $region3: #{multi_level_norm_forward.3} parent=0 // pred_check_branch
    %9 = sbr.rel (0) target = $region5
  $region4: #{multi_level_norm_forward.3} parent=0 // pred_region
    _
  $region5: #{multi_level_norm_forward.3} parent=0 // pred_fallthru
    _
  // Predicated region
  $region6: #{multi_level_norm_forward.3} parent=0 // pred_check
    _
  $region7: #{multi_level_norm_forward.3} parent=0 // pred_check_branch
    %11 = sbr.rel (0) target = $region9
  $region8: #{multi_level_norm_forward.3} parent=0 // pred_region
    _
  $region9: #{multi_level_norm_forward.3} parent=0 // pred_fallthru
    _
  // Predicated region
  $region10: #{multi_level_norm_forward.3} parent=0 // pred_check
    _
  $region11: #{multi_level_norm_forward.3} parent=0 // pred_check_branch
    %13 = sbr.rel (0) target = $region13
  $region12: #{multi_level_norm_forward.3} parent=0 // pred_region
    _
  $region13: #{multi_level_norm_forward.3} parent=0 // pred_fallthru
    _
  %v14 = vld [vmem:[%s0] sm:$0xff]
  %v15 = vld [vmem:[%s0 + $0x8] sm:$0xff]
  %v16 = vld [vmem:[%s1] sm:$0xff]
  %18 = vset.pattern.permute.xlu0 0
  %19 = vperm.xlu0 %18, %v16
  %v20 = vpop.permute.xlu0 %19
  %v22 = vmul.f32 %v14, %v20
  %v23 = vmul.f32 %v15, %v20
  %v24 = vld [vmem:[%s2] sm:$0xff]
  %26 = vset.pattern.permute.xlu0 0
  %27 = vperm.xlu0 %26, %v24
  %v28 = vpop.permute.xlu0 %27
  %v30 = vadd.f32 %v22, %v28
  %v31 = vadd.f32 %v23, %v28
  %32 = vst [vmem:[%s3] sm:$0xff] %v30
  %33 = vst [vmem:[%s3 + $0x8] sm:$0xff] %v31
  // Predicated region
  $region14: #{multi_level_norm_forward.3} parent=0 // pred_check
    _
  $region15: #{multi_level_norm_forward.3} parent=0 // pred_check_branch
    %35 = sbr.rel (0) target = $region17
  $region16: #{multi_level_norm_forward.3} parent=0 // pred_region
    _
  $region17: #{multi_level_norm_forward.3} parent=0 // pred_fallthru
    _
  // Predicated region
  $region18: #{multi_level_norm_forward.3} parent=0 // pred_check
    _
  $region19: #{multi_level_norm_forward.3} parent=0 // pred_check_branch
    %37 = sbr.rel (0) target = $region21
  $region20: #{multi_level_norm_forward.3} parent=0 // pred_region
    _
  $region21: #{multi_level_norm_forward.3} parent=0 // pred_fallthru
    _

</llo_original>
